<compile_context>
chip_gen: v6e
topology: v6e:2x2x1
jax: 0.10.0
libtpu: 0.0.40
codegen_flags: <defaults>
</compile_context>

<pallas_src>
import functools

import jax
import jax.numpy as jnp
from jax import lax
from jax.experimental import pallas as pl
from jax.experimental.pallas import tpu as pltpu

LANES = 128


def lstm_kernel(x_ref, wx_ref, bx_ref, whh_ref, wout_ref, bout_ref, y_ref,
                *, seq_len, batch, hid):
    """Whole sequence in one kernel invocation.

    x_ref:    (T*B, D)     time-major, flattened inputs (f32)
    wx_ref:   (D, 4H)      folded emb+input-gate weights, pre-transposed (f32)
    bx_ref:   (1, 4H)      folded bias  b_emb@w_ih.T + b_ih + b_hh (f32)
    whh_ref:  (H, 4H)      recurrent weights, pre-transposed, bf16
    wout_ref: (H, Dpad)    output Linear weights, pre-transposed, zero-padded
    bout_ref: (1, Dpad)
    y_ref:    (T*B, Dpad)  lane-dense output slab
    """
    H = hid
    B = batch

    # Input-side gate pre-activations for ALL time steps: one batched MXU
    # matmul over T*B rows, hoisted off the serial recurrence.
    gx = (jnp.dot(x_ref[...], wx_ref[...], preferred_element_type=jnp.float32)
          + bx_ref[...])                                        # (T*B, 4H) f32

    whh = whh_ref[...]                                          # (H, 4H) bf16

    h = jnp.zeros((B, H), jnp.float32)
    c = jnp.zeros((B, H), jnp.float32)
    hs = []                                                     # vreg-resident

    # Serial recurrence, fully unrolled (seq_len small & static) -> straight
    # line code for the scheduler.  Only h@W_hh + elementwise gate math remain
    # on the critical path.
    for t in range(seq_len):
        rows = slice(t * B, (t + 1) * B)
        # Recurrent matmul: bf16 operands, f32 accumulation (MXU-native).
        z = gx[rows, :] + jnp.dot(h.astype(jnp.bfloat16), whh,
                                  preferred_element_type=jnp.float32)  # (B,4H)
        # Two full-width transcendentals (1 vreg each) instead of 4 per-gate.
        sig = jax.nn.sigmoid(z)                                 # [ i | f | . | o ]
        tnh = jnp.tanh(z)                                       # [ . | . | g | . ]
        i_g = sig[:, 0 * H:1 * H]
        f_g = sig[:, 1 * H:2 * H]
        g_g = tnh[:, 2 * H:3 * H]
        o_g = sig[:, 3 * H:4 * H]
        c = f_g * c + i_g * g_g
        h = o_g * jnp.tanh(c)                                   # 3rd EUP push
        hs.append(h)

    # Stack hidden states once (off the per-step path) and run a single
    # batched (T*B, H) @ (H, Dpad) output projection; lane-dense store.
    hs_all = jnp.concatenate(hs, axis=0)                        # (T*B, H)
    y_ref[...] = (jnp.dot(hs_all, wout_ref[...],
                          preferred_element_type=jnp.float32)
                  + bout_ref[...]).astype(y_ref.dtype)


@jax.jit
def base_model_forward(x_btd, params):
    """x_btd: (B, T, D) float32 (batch_first, like nn.LSTM(batch_first=True))."""
    B, T, D = x_btd.shape
    H = params["w_emb"].shape[0]
    d_pad = LANES * ((D + LANES - 1) // LANES)

    # ---- trace-time weight folding / pre-transposition (exact algebra) ----
    # emb then LSTM input projection have no nonlinearity in between, so:
    #   W_x = W_ih @ W_emb,  b_x = b_emb @ W_ih.T + b_ih + b_hh
    w_x = jnp.dot(params["w_ih"], params["w_emb"]).T                 # (D, 4H)
    b_x = (jnp.dot(params["b_emb"][0], params["w_ih"].T)
           + params["b_ih"][0] + params["b_hh"][0])[None, :]         # (1, 4H)
    w_hh_bf = params["w_hh"].T.astype(jnp.bfloat16)                  # (H, 4H) bf16
    # Lane-dense (zero-padded) output projection.
    w_out_p = jnp.zeros((H, d_pad), jnp.float32).at[:, :D].set(params["w_out"].T)
    b_out_p = jnp.zeros((1, d_pad), jnp.float32).at[:, :D].set(params["b_out"][0])

    # Time-major, (T*B)-flattened rows so non-recurrent matmuls batch over T*B.
    x_flat = jnp.transpose(x_btd, (1, 0, 2)).reshape(T * B, D)

    vmem = pl.BlockSpec(memory_space=pltpu.MemorySpace.VMEM)
    y_pad = pl.pallas_call(
        functools.partial(lstm_kernel, seq_len=T, batch=B, hid=H),
        out_shape=jax.ShapeDtypeStruct((T * B, d_pad), jnp.float32),
        in_specs=[vmem, vmem, vmem, vmem, vmem, vmem],
        out_specs=vmem,
    )(x_flat, w_x, b_x, w_hh_bf, w_out_p, b_out_p)

    y_flat = y_pad[:, :D]                                            # drop pad lanes
    return jnp.transpose(y_flat.reshape(T, B, D), (1, 0, 2))         # (B, T, D)


def reference_forward(x_btd, params):
    """Pure-JAX f32 reference mirroring PyTorch BaseModel.forward (un-folded)."""
    H = params["w_emb"].shape[0]
    emb = jnp.einsum("btd,hd->bth", x_btd, params["w_emb"]) + params["b_emb"][0]

    def step(carry, x_t):
        h, c = carry
        gates = (x_t @ params["w_ih"].T + params["b_ih"][0]
                 + h @ params["w_hh"].T + params["b_hh"][0])
        i = jax.nn.sigmoid(gates[:, 0 * H:1 * H])
        f = jax.nn.sigmoid(gates[:, 1 * H:2 * H])
        g = jnp.tanh(gates[:, 2 * H:3 * H])
        o = jax.nn.sigmoid(gates[:, 3 * H:4 * H])
        c = f * c + i * g
        h = o * jnp.tanh(c)
        return (h, c), h

    B = x_btd.shape[0]
    h0 = jnp.zeros((B, H), jnp.float32)
    c0 = jnp.zeros((B, H), jnp.float32)
    _, hs = lax.scan(step, (h0, c0), jnp.transpose(emb, (1, 0, 2)))
    hs = jnp.transpose(hs, (1, 0, 2))                                 # (B, T, H)
    return jnp.einsum("bth,dh->btd", hs, params["w_out"]) + params["b_out"][0]


def init_params(key, dim, hid_dim):
    """Deterministic init mirroring PyTorch default shapes (uniform +-1/sqrt(fan))."""
    ks = jax.random.split(key, 8)
    u = lambda k, shape, bound: jax.random.uniform(
        k, shape, jnp.float32, minval=-bound, maxval=bound)
    k_lin_emb = 1.0 / (dim ** 0.5)
    k_lstm = 1.0 / (hid_dim ** 0.5)
    k_lin_out = 1.0 / (hid_dim ** 0.5)
    return {
        "w_emb": u(ks[0], (hid_dim, dim), k_lin_emb),
        "b_emb": u(ks[1], (1, hid_dim), k_lin_emb),
        "w_ih":  u(ks[2], (4 * hid_dim, hid_dim), k_lstm),
        "b_ih":  u(ks[3], (1, 4 * hid_dim), k_lstm),
        "w_hh":  u(ks[4], (4 * hid_dim, hid_dim), k_lstm),
        "b_hh":  u(ks[5], (1, 4 * hid_dim), k_lstm),
        "w_out": u(ks[6], (dim, hid_dim), k_lin_out),
        "b_out": u(ks[7], (1, dim), k_lin_out),
    }


if __name__ == "__main__":
    dim, length, hid_dim, batch = 4, 8, 32, 2

    key = jax.random.PRNGKey(0)
    k_x, k_p = jax.random.split(key)
    x = jax.random.normal(k_x, (batch, length, dim), jnp.float32)
    params = init_params(k_p, dim, hid_dim)

    out = jax.block_until_ready(base_model_forward(x, params))
    ref = jax.block_until_ready(reference_forward(x, params))

    assert out.shape == (batch, length, dim)
    # Tolerance 5e-3 (was 1e-4): the bf16-operand recurrent matmul (per perf
    # review) perturbs operand rounding vs the pure-f32 reference; observed
    # deviations are O(1e-4..1e-3).  Accumulation stays f32 throughout.
    assert jnp.allclose(out, ref, atol=5e-3, rtol=5e-3), "Pallas kernel mismatch vs reference"
    print("KERNEL_OK")
</pallas_src>

<mosaic_0001>
module attributes {stable_mosaic.version = 11 : i64} {
  func.func @lstm_kernel(%arg0: memref<16x4xf32, #tpu.memory_space<vmem>>, %arg1: memref<4x128xf32, #tpu.memory_space<vmem>>, %arg2: memref<1x128xf32, #tpu.memory_space<vmem>>, %arg3: memref<32x128xbf16, #tpu.memory_space<vmem>>, %arg4: memref<32x128xf32, #tpu.memory_space<vmem>>, %arg5: memref<1x128xf32, #tpu.memory_space<vmem>>, %arg6: memref<16x128xf32, #tpu.memory_space<vmem>>) attributes {dimension_semantics = [], scalar_prefetch = 0 : i64, scratch_operands = 0 : i64, tpu.core_type = #tpu.core_type<tc>} {
    %c0 = arith.constant 0 : index
    %c0_0 = arith.constant 0 : index
    %0 = vector.load %arg0[%c0, %c0_0] : memref<16x4xf32, #tpu.memory_space<vmem>>, vector<16x4xf32>
    %c0_1 = arith.constant 0 : index
    %c0_2 = arith.constant 0 : index
    %1 = vector.load %arg1[%c0_1, %c0_2] : memref<4x128xf32, #tpu.memory_space<vmem>>, vector<4x128xf32>
    %cst = arith.constant dense<0.000000e+00> : vector<16x128xf32>
    %2 = tpu.matmul %0, %1, %cst {dimension_numbers = #tpu.dot_dimension_numbers<[1], [0], [0], [1], [0, 0, 1, 1], [], []>} : vector<16x4xf32>, vector<4x128xf32>, vector<16x128xf32> -> vector<16x128xf32>
    %c0_3 = arith.constant 0 : index
    %c0_4 = arith.constant 0 : index
    %3 = vector.load %arg2[%c0_3, %c0_4] : memref<1x128xf32, #tpu.memory_space<vmem>>, vector<1x128xf32>
    %4 = vector.broadcast %3 : vector<1x128xf32> to vector<16x128xf32>
    %5 = arith.addf %2, %4 : vector<16x128xf32>
    %c0_5 = arith.constant 0 : index
    %c0_6 = arith.constant 0 : index
    %6 = vector.load %arg3[%c0_5, %c0_6] : memref<32x128xbf16, #tpu.memory_space<vmem>>, vector<32x128xbf16>
    %cst_7 = arith.constant 0.000000e+00 : f32
    %7 = vector.broadcast %cst_7 : f32 to vector<2x32xf32>
    %cst_8 = arith.constant 0.000000e+00 : f32
    %8 = vector.broadcast %cst_8 : f32 to vector<2x32xf32>
    %9 = vector.extract_strided_slice %5 {offsets = [0, 0], sizes = [2, 128], strides = [1, 1]} : vector<16x128xf32> to vector<2x128xf32>
    %10 = arith.truncf %7 : vector<2x32xf32> to vector<2x32xbf16>
    %cst_9 = arith.constant dense<0.000000e+00> : vector<2x128xf32>
    %11 = tpu.matmul %10, %6, %cst_9 {dimension_numbers = #tpu.dot_dimension_numbers<[1], [0], [0], [1], [0, 0, 1, 1], [], []>} : vector<2x32xbf16>, vector<32x128xbf16>, vector<2x128xf32> -> vector<2x128xf32>
    %12 = arith.addf %9, %11 : vector<2x128xf32>
    %13 = arith.negf %12 : vector<2x128xf32>
    %14 = math.exp %13 : vector<2x128xf32>
    %cst_10 = arith.constant 1.000000e+00 : f32
    %15 = vector.broadcast %cst_10 : f32 to vector<2x128xf32>
    %16 = arith.addf %15, %14 : vector<2x128xf32>
    %17 = arith.divf %15, %16 : vector<2x128xf32>
    %18 = math.tanh %12 : vector<2x128xf32>
    %19 = vector.extract_strided_slice %17 {offsets = [0, 0], sizes = [2, 32], strides = [1, 1]} : vector<2x128xf32> to vector<2x32xf32>
    %20 = vector.extract_strided_slice %17 {offsets = [0, 32], sizes = [2, 32], strides = [1, 1]} : vector<2x128xf32> to vector<2x32xf32>
    %21 = vector.extract_strided_slice %18 {offsets = [0, 64], sizes = [2, 32], strides = [1, 1]} : vector<2x128xf32> to vector<2x32xf32>
    %22 = vector.extract_strided_slice %17 {offsets = [0, 96], sizes = [2, 32], strides = [1, 1]} : vector<2x128xf32> to vector<2x32xf32>
    %23 = arith.mulf %20, %8 : vector<2x32xf32>
    %24 = arith.mulf %19, %21 : vector<2x32xf32>
    %25 = arith.addf %23, %24 : vector<2x32xf32>
    %26 = math.tanh %25 : vector<2x32xf32>
    %27 = arith.mulf %22, %26 : vector<2x32xf32>
    %28 = vector.extract_strided_slice %5 {offsets = [2, 0], sizes = [2, 128], strides = [1, 1]} : vector<16x128xf32> to vector<2x128xf32>
    %29 = arith.truncf %27 : vector<2x32xf32> to vector<2x32xbf16>
    %cst_11 = arith.constant dense<0.000000e+00> : vector<2x128xf32>
    %30 = tpu.matmul %29, %6, %cst_11 {dimension_numbers = #tpu.dot_dimension_numbers<[1], [0], [0], [1], [0, 0, 1, 1], [], []>} : vector<2x32xbf16>, vector<32x128xbf16>, vector<2x128xf32> -> vector<2x128xf32>
    %31 = arith.addf %28, %30 : vector<2x128xf32>
    %32 = arith.negf %31 : vector<2x128xf32>
    %33 = math.exp %32 : vector<2x128xf32>
    %cst_12 = arith.constant 1.000000e+00 : f32
    %34 = vector.broadcast %cst_12 : f32 to vector<2x128xf32>
    %35 = arith.addf %34, %33 : vector<2x128xf32>
    %36 = arith.divf %34, %35 : vector<2x128xf32>
    %37 = math.tanh %31 : vector<2x128xf32>
    %38 = vector.extract_strided_slice %36 {offsets = [0, 0], sizes = [2, 32], strides = [1, 1]} : vector<2x128xf32> to vector<2x32xf32>
    %39 = vector.extract_strided_slice %36 {offsets = [0, 32], sizes = [2, 32], strides = [1, 1]} : vector<2x128xf32> to vector<2x32xf32>
    %40 = vector.extract_strided_slice %37 {offsets = [0, 64], sizes = [2, 32], strides = [1, 1]} : vector<2x128xf32> to vector<2x32xf32>
    %41 = vector.extract_strided_slice %36 {offsets = [0, 96], sizes = [2, 32], strides = [1, 1]} : vector<2x128xf32> to vector<2x32xf32>
    %42 = arith.mulf %39, %25 : vector<2x32xf32>
    %43 = arith.mulf %38, %40 : vector<2x32xf32>
    %44 = arith.addf %42, %43 : vector<2x32xf32>
    %45 = math.tanh %44 : vector<2x32xf32>
    %46 = arith.mulf %41, %45 : vector<2x32xf32>
    %47 = vector.extract_strided_slice %5 {offsets = [4, 0], sizes = [2, 128], strides = [1, 1]} : vector<16x128xf32> to vector<2x128xf32>
    %48 = arith.truncf %46 : vector<2x32xf32> to vector<2x32xbf16>
    %cst_13 = arith.constant dense<0.000000e+00> : vector<2x128xf32>
    %49 = tpu.matmul %48, %6, %cst_13 {dimension_numbers = #tpu.dot_dimension_numbers<[1], [0], [0], [1], [0, 0, 1, 1], [], []>} : vector<2x32xbf16>, vector<32x128xbf16>, vector<2x128xf32> -> vector<2x128xf32>
    %50 = arith.addf %47, %49 : vector<2x128xf32>
    %51 = arith.negf %50 : vector<2x128xf32>
    %52 = math.exp %51 : vector<2x128xf32>
    %cst_14 = arith.constant 1.000000e+00 : f32
    %53 = vector.broadcast %cst_14 : f32 to vector<2x128xf32>
    %54 = arith.addf %53, %52 : vector<2x128xf32>
    %55 = arith.divf %53, %54 : vector<2x128xf32>
    %56 = math.tanh %50 : vector<2x128xf32>
    %57 = vector.extract_strided_slice %55 {offsets = [0, 0], sizes = [2, 32], strides = [1, 1]} : vector<2x128xf32> to vector<2x32xf32>
    %58 = vector.extract_strided_slice %55 {offsets = [0, 32], sizes = [2, 32], strides = [1, 1]} : vector<2x128xf32> to vector<2x32xf32>
    %59 = vector.extract_strided_slice %56 {offsets = [0, 64], sizes = [2, 32], strides = [1, 1]} : vector<2x128xf32> to vector<2x32xf32>
    %60 = vector.extract_strided_slice %55 {offsets = [0, 96], sizes = [2, 32], strides = [1, 1]} : vector<2x128xf32> to vector<2x32xf32>
    %61 = arith.mulf %58, %44 : vector<2x32xf32>
    %62 = arith.mulf %57, %59 : vector<2x32xf32>
    %63 = arith.addf %61, %62 : vector<2x32xf32>
    %64 = math.tanh %63 : vector<2x32xf32>
    %65 = arith.mulf %60, %64 : vector<2x32xf32>
    %66 = vector.extract_strided_slice %5 {offsets = [6, 0], sizes = [2, 128], strides = [1, 1]} : vector<16x128xf32> to vector<2x128xf32>
    %67 = arith.truncf %65 : vector<2x32xf32> to vector<2x32xbf16>
    %cst_15 = arith.constant dense<0.000000e+00> : vector<2x128xf32>
    %68 = tpu.matmul %67, %6, %cst_15 {dimension_numbers = #tpu.dot_dimension_numbers<[1], [0], [0], [1], [0, 0, 1, 1], [], []>} : vector<2x32xbf16>, vector<32x128xbf16>, vector<2x128xf32> -> vector<2x128xf32>
    %69 = arith.addf %66, %68 : vector<2x128xf32>
    %70 = arith.negf %69 : vector<2x128xf32>
    %71 = math.exp %70 : vector<2x128xf32>
    %cst_16 = arith.constant 1.000000e+00 : f32
    %72 = vector.broadcast %cst_16 : f32 to vector<2x128xf32>
    %73 = arith.addf %72, %71 : vector<2x128xf32>
    %74 = arith.divf %72, %73 : vector<2x128xf32>
    %75 = math.tanh %69 : vector<2x128xf32>
    %76 = vector.extract_strided_slice %74 {offsets = [0, 0], sizes = [2, 32], strides = [1, 1]} : vector<2x128xf32> to vector<2x32xf32>
    %77 = vector.extract_strided_slice %74 {offsets = [0, 32], sizes = [2, 32], strides = [1, 1]} : vector<2x128xf32> to vector<2x32xf32>
    %78 = vector.extract_strided_slice %75 {offsets = [0, 64], sizes = [2, 32], strides = [1, 1]} : vector<2x128xf32> to vector<2x32xf32>
    %79 = vector.extract_strided_slice %74 {offsets = [0, 96], sizes = [2, 32], strides = [1, 1]} : vector<2x128xf32> to vector<2x32xf32>
    %80 = arith.mulf %77, %63 : vector<2x32xf32>
    %81 = arith.mulf %76, %78 : vector<2x32xf32>
    %82 = arith.addf %80, %81 : vector<2x32xf32>
    %83 = math.tanh %82 : vector<2x32xf32>
    %84 = arith.mulf %79, %83 : vector<2x32xf32>
    %85 = vector.extract_strided_slice %5 {offsets = [8, 0], sizes = [2, 128], strides = [1, 1]} : vector<16x128xf32> to vector<2x128xf32>
    %86 = arith.truncf %84 : vector<2x32xf32> to vector<2x32xbf16>
    %cst_17 = arith.constant dense<0.000000e+00> : vector<2x128xf32>
    %87 = tpu.matmul %86, %6, %cst_17 {dimension_numbers = #tpu.dot_dimension_numbers<[1], [0], [0], [1], [0, 0, 1, 1], [], []>} : vector<2x32xbf16>, vector<32x128xbf16>, vector<2x128xf32> -> vector<2x128xf32>
    %88 = arith.addf %85, %87 : vector<2x128xf32>
    %89 = arith.negf %88 : vector<2x128xf32>
    %90 = math.exp %89 : vector<2x128xf32>
    %cst_18 = arith.constant 1.000000e+00 : f32
    %91 = vector.broadcast %cst_18 : f32 to vector<2x128xf32>
    %92 = arith.addf %91, %90 : vector<2x128xf32>
    %93 = arith.divf %91, %92 : vector<2x128xf32>
    %94 = math.tanh %88 : vector<2x128xf32>
    %95 = vector.extract_strided_slice %93 {offsets = [0, 0], sizes = [2, 32], strides = [1, 1]} : vector<2x128xf32> to vector<2x32xf32>
    %96 = vector.extract_strided_slice %93 {offsets = [0, 32], sizes = [2, 32], strides = [1, 1]} : vector<2x128xf32> to vector<2x32xf32>
    %97 = vector.extract_strided_slice %94 {offsets = [0, 64], sizes = [2, 32], strides = [1, 1]} : vector<2x128xf32> to vector<2x32xf32>
    %98 = vector.extract_strided_slice %93 {offsets = [0, 96], sizes = [2, 32], strides = [1, 1]} : vector<2x128xf32> to vector<2x32xf32>
    %99 = arith.mulf %96, %82 : vector<2x32xf32>
    %100 = arith.mulf %95, %97 : vector<2x32xf32>
    %101 = arith.addf %99, %100 : vector<2x32xf32>
    %102 = math.tanh %101 : vector<2x32xf32>
    %103 = arith.mulf %98, %102 : vector<2x32xf32>
    %104 = vector.extract_strided_slice %5 {offsets = [10, 0], sizes = [2, 128], strides = [1, 1]} : vector<16x128xf32> to vector<2x128xf32>
    %105 = arith.truncf %103 : vector<2x32xf32> to vector<2x32xbf16>
    %cst_19 = arith.constant dense<0.000000e+00> : vector<2x128xf32>
    %106 = tpu.matmul %105, %6, %cst_19 {dimension_numbers = #tpu.dot_dimension_numbers<[1], [0], [0], [1], [0, 0, 1, 1], [], []>} : vector<2x32xbf16>, vector<32x128xbf16>, vector<2x128xf32> -> vector<2x128xf32>
    %107 = arith.addf %104, %106 : vector<2x128xf32>
    %108 = arith.negf %107 : vector<2x128xf32>
    %109 = math.exp %108 : vector<2x128xf32>
    %cst_20 = arith.constant 1.000000e+00 : f32
    %110 = vector.broadcast %cst_20 : f32 to vector<2x128xf32>
    %111 = arith.addf %110, %109 : vector<2x128xf32>
    %112 = arith.divf %110, %111 : vector<2x128xf32>
    %113 = math.tanh %107 : vector<2x128xf32>
    %114 = vector.extract_strided_slice %112 {offsets = [0, 0], sizes = [2, 32], strides = [1, 1]} : vector<2x128xf32> to vector<2x32xf32>
    %115 = vector.extract_strided_slice %112 {offsets = [0, 32], sizes = [2, 32], strides = [1, 1]} : vector<2x128xf32> to vector<2x32xf32>
    %116 = vector.extract_strided_slice %113 {offsets = [0, 64], sizes = [2, 32], strides = [1, 1]} : vector<2x128xf32> to vector<2x32xf32>
    %117 = vector.extract_strided_slice %112 {offsets = [0, 96], sizes = [2, 32], strides = [1, 1]} : vector<2x128xf32> to vector<2x32xf32>
    %118 = arith.mulf %115, %101 : vector<2x32xf32>
    %119 = arith.mulf %114, %116 : vector<2x32xf32>
    %120 = arith.addf %118, %119 : vector<2x32xf32>
    %121 = math.tanh %120 : vector<2x32xf32>
    %122 = arith.mulf %117, %121 : vector<2x32xf32>
    %123 = vector.extract_strided_slice %5 {offsets = [12, 0], sizes = [2, 128], strides = [1, 1]} : vector<16x128xf32> to vector<2x128xf32>
    %124 = arith.truncf %122 : vector<2x32xf32> to vector<2x32xbf16>
    %cst_21 = arith.constant dense<0.000000e+00> : vector<2x128xf32>
    %125 = tpu.matmul %124, %6, %cst_21 {dimension_numbers = #tpu.dot_dimension_numbers<[1], [0], [0], [1], [0, 0, 1, 1], [], []>} : vector<2x32xbf16>, vector<32x128xbf16>, vector<2x128xf32> -> vector<2x128xf32>
    %126 = arith.addf %123, %125 : vector<2x128xf32>
    %127 = arith.negf %126 : vector<2x128xf32>
    %128 = math.exp %127 : vector<2x128xf32>
    %cst_22 = arith.constant 1.000000e+00 : f32
    %129 = vector.broadcast %cst_22 : f32 to vector<2x128xf32>
    %130 = arith.addf %129, %128 : vector<2x128xf32>
    %131 = arith.divf %129, %130 : vector<2x128xf32>
    %132 = math.tanh %126 : vector<2x128xf32>
    %133 = vector.extract_strided_slice %131 {offsets = [0, 0], sizes = [2, 32], strides = [1, 1]} : vector<2x128xf32> to vector<2x32xf32>
    %134 = vector.extract_strided_slice %131 {offsets = [0, 32], sizes = [2, 32], strides = [1, 1]} : vector<2x128xf32> to vector<2x32xf32>
    %135 = vector.extract_strided_slice %132 {offsets = [0, 64], sizes = [2, 32], strides = [1, 1]} : vector<2x128xf32> to vector<2x32xf32>
    %136 = vector.extract_strided_slice %131 {offsets = [0, 96], sizes = [2, 32], strides = [1, 1]} : vector<2x128xf32> to vector<2x32xf32>
    %137 = arith.mulf %134, %120 : vector<2x32xf32>
    %138 = arith.mulf %133, %135 : vector<2x32xf32>
    %139 = arith.addf %137, %138 : vector<2x32xf32>
    %140 = math.tanh %139 : vector<2x32xf32>
    %141 = arith.mulf %136, %140 : vector<2x32xf32>
    %142 = vector.extract_strided_slice %5 {offsets = [14, 0], sizes = [2, 128], strides = [1, 1]} : vector<16x128xf32> to vector<2x128xf32>
    %143 = arith.truncf %141 : vector<2x32xf32> to vector<2x32xbf16>
    %cst_23 = arith.constant dense<0.000000e+00> : vector<2x128xf32>
    %144 = tpu.matmul %143, %6, %cst_23 {dimension_numbers = #tpu.dot_dimension_numbers<[1], [0], [0], [1], [0, 0, 1, 1], [], []>} : vector<2x32xbf16>, vector<32x128xbf16>, vector<2x128xf32> -> vector<2x128xf32>
    %145 = arith.addf %142, %144 : vector<2x128xf32>
    %146 = arith.negf %145 : vector<2x128xf32>
    %147 = math.exp %146 : vector<2x128xf32>
    %cst_24 = arith.constant 1.000000e+00 : f32
    %148 = vector.broadcast %cst_24 : f32 to vector<2x128xf32>
    %149 = arith.addf %148, %147 : vector<2x128xf32>
    %150 = arith.divf %148, %149 : vector<2x128xf32>
    %151 = math.tanh %145 : vector<2x128xf32>
    %152 = vector.extract_strided_slice %150 {offsets = [0, 0], sizes = [2, 32], strides = [1, 1]} : vector<2x128xf32> to vector<2x32xf32>
    %153 = vector.extract_strided_slice %150 {offsets = [0, 32], sizes = [2, 32], strides = [1, 1]} : vector<2x128xf32> to vector<2x32xf32>
    %154 = vector.extract_strided_slice %151 {offsets = [0, 64], sizes = [2, 32], strides = [1, 1]} : vector<2x128xf32> to vector<2x32xf32>
    %155 = vector.extract_strided_slice %150 {offsets = [0, 96], sizes = [2, 32], strides = [1, 1]} : vector<2x128xf32> to vector<2x32xf32>
    %156 = arith.mulf %153, %139 : vector<2x32xf32>
    %157 = arith.mulf %152, %154 : vector<2x32xf32>
    %158 = arith.addf %156, %157 : vector<2x32xf32>
    %159 = math.tanh %158 : vector<2x32xf32>
    %160 = arith.mulf %155, %159 : vector<2x32xf32>
    %161 = tpu.concatenate %27, %46, %65, %84, %103, %122, %141, %160 in 0 : vector<2x32xf32>, vector<2x32xf32>, vector<2x32xf32>, vector<2x32xf32>, vector<2x32xf32>, vector<2x32xf32>, vector<2x32xf32>, vector<2x32xf32> -> vector<16x32xf32>
    %c0_25 = arith.constant 0 : index
    %c0_26 = arith.constant 0 : index
    %162 = vector.load %arg4[%c0_25, %c0_26] : memref<32x128xf32, #tpu.memory_space<vmem>>, vector<32x128xf32>
    %cst_27 = arith.constant dense<0.000000e+00> : vector<16x128xf32>
    %163 = tpu.matmul %161, %162, %cst_27 {dimension_numbers = #tpu.dot_dimension_numbers<[1], [0], [0], [1], [0, 0, 1, 1], [], []>} : vector<16x32xf32>, vector<32x128xf32>, vector<16x128xf32> -> vector<16x128xf32>
    %c0_28 = arith.constant 0 : index
    %c0_29 = arith.constant 0 : index
    %164 = vector.load %arg5[%c0_28, %c0_29] : memref<1x128xf32, #tpu.memory_space<vmem>>, vector<1x128xf32>
    %165 = vector.broadcast %164 : vector<1x128xf32> to vector<16x128xf32>
    %166 = arith.addf %163, %165 : vector<16x128xf32>
    %c0_30 = arith.constant 0 : index
    %c0_31 = arith.constant 0 : index
    %167 = vector.load %arg6[%c0_30, %c0_31] : memref<16x128xf32, #tpu.memory_space<vmem>>, vector<16x128xf32>
    tpu.vector_store %arg6[%c0_30, %c0_31], %166 {strides = array<i32>} : memref<16x128xf32, #tpu.memory_space<vmem>>, vector<16x128xf32>,
    return
  }
}

</mosaic_0001>

<llo_original>
// kernel: base_model_forward.1
$region0: #{base_model_forward.1}
  #allocation0 [shape = 'u32[]', space=smem, size = 0x4, offset = 0x4, fixed_abs, tag = 'smem constant byte address 0x4 - core index']
  #allocation1 [shape = 'u32[144,128]{1,0:T(1,128)}', space=vmem, size = 0x12000, scoped, tag = 'internal scratch']
  %s0 = inlined_call_operand.vmem [shape: f32[16,4], index: 0, kind: input, shape index: {}]
  %s1 = inlined_call_operand.vmem [shape: f32[4,128], index: 1, kind: input, shape index: {}]
  %s2 = inlined_call_operand.vmem [shape: f32[1,128], index: 2, kind: input, shape index: {}]
  %s3 = inlined_call_operand.vmem [shape: bf16[32,128], index: 3, kind: input, shape index: {}]
  %s4 = inlined_call_operand.vmem [shape: f32[32,128], index: 4, kind: input, shape index: {}]
  %s5 = inlined_call_operand.vmem [shape: f32[1,128], index: 5, kind: input, shape index: {}]
  %s6 = inlined_call_operand.vmem [shape: f32[16,128], index: 6, kind: output, shape index: {}]
  %s7 = sld [smem:[#allocation0]]
  $region34: #{base_model_forward.1} parent=0
    _
  %s9 = ssub.s32 1, %s7
  %s10 = scalar_select 0, %s9, %s7
  // Predicated region
  $region2: #{base_model_forward.1} parent=0 // pred_check
    _
  $region3: #{base_model_forward.1} parent=0 // pred_check_branch
    %12 = sbr.rel (0) target = $region5
  $region4: #{base_model_forward.1} parent=0 // pred_region
    _
  $region5: #{base_model_forward.1} parent=0 // pred_fallthru
    _
  // Predicated region
  $region6: #{base_model_forward.1} parent=0 // pred_check
    _
  $region7: #{base_model_forward.1} parent=0 // pred_check_branch
    %14 = sbr.rel (0) target = $region9
  $region8: #{base_model_forward.1} parent=0 // pred_region
    _
  $region9: #{base_model_forward.1} parent=0 // pred_fallthru
    _
  // Predicated region
  $region10: #{base_model_forward.1} parent=0 // pred_check
    _
  $region11: #{base_model_forward.1} parent=0 // pred_check_branch
    %16 = sbr.rel (0) target = $region13
  $region12: #{base_model_forward.1} parent=0 // pred_region
    _
  $region13: #{base_model_forward.1} parent=0 // pred_fallthru
    _
  // Predicated region
  $region14: #{base_model_forward.1} parent=0 // pred_check
    _
  $region15: #{base_model_forward.1} parent=0 // pred_check_branch
    %18 = sbr.rel (0) target = $region17
  $region16: #{base_model_forward.1} parent=0 // pred_region
    _
  $region17: #{base_model_forward.1} parent=0 // pred_fallthru
    _
  // Predicated region
  $region18: #{base_model_forward.1} parent=0 // pred_check
    _
  $region19: #{base_model_forward.1} parent=0 // pred_check_branch
    %20 = sbr.rel (0) target = $region21
  $region20: #{base_model_forward.1} parent=0 // pred_region
    _
  $region21: #{base_model_forward.1} parent=0 // pred_fallthru
    _
  // Predicated region
  $region22: #{base_model_forward.1} parent=0 // pred_check
    _
  $region23: #{base_model_forward.1} parent=0 // pred_check_branch
    %22 = sbr.rel (0) target = $region25
  $region24: #{base_model_forward.1} parent=0 // pred_region
    _
  $region25: #{base_model_forward.1} parent=0 // pred_fallthru
    _
  %v24 = vld [vmem:[%s0] sm:$0xff]
  %v25 = vld [vmem:[%s0 + $0x8] sm:$0xff]
  %v26 = vld [vmem:[%s1] sm:$0xf]
  %v27 = vld [vmem:[%s2] sm:$0x1]
  %v29 = vlaneseq
  %v30 = vshrl.u32 %v29, 7
  %v31 = vsub.s32 0, %v30
  %v32 = vrot.slane %v27, %v31
  %vm34 = vcmask 31744
  %v36 = vsel %vm34, %v24, 0
  %v39 = vsel %vm34, %v25, 0
  %vm41 = vcmask 1043456
  %v43 = vsel %vm41, %v26, 0
  %45 = vmatprep.subr.mxu0 0.0
  %46 = vmatpush1.msra.mxu0 0.0
  %47 = vmatprep.subr.mxu0 0.0
  %48 = vmatpush1.msra.mxu0 0.0
  %49 = vmatprep.subr.mxu0 0.0
  %50 = vmatpush1.msra.mxu0 0.0
  %51 = vmatprep.subr.mxu0 0.0
  %52 = vmatpush1.msra.mxu0 0.0
  %53 = vmatprep.subr.mxu0 0.0
  %54 = vmatpush1.msra.mxu0 0.0
  %55 = vmatprep.subr.mxu0 0.0
  %56 = vmatpush1.msra.mxu0 0.0
  %57 = vmatprep.subr.mxu0 0.0
  %58 = vmatpush1.msra.mxu0 0.0
  %59 = vmatprep.subr.mxu0 0.0
  %60 = vmatpush1.msra.mxu0 0.0
  %61 = vmatprep.subr.mxu0 0.0
  %62 = vmatpush1.msra.mxu0 0.0
  %63 = vmatprep.subr.mxu0 0.0
  %64 = vmatpush1.msra.mxu0 0.0
  %65 = vmatprep.subr.mxu0 0.0
  %66 = vmatpush1.msra.mxu0 0.0
  %67 = vmatprep.subr.mxu0 0.0
  %68 = vmatpush1.msra.mxu0 0.0
  %69 = vmatprep.subr.mxu0 0.0
  %70 = vmatpush1.msra.mxu0 0.0
  %71 = vmatprep.subr.mxu0 0.0
  %72 = vmatpush1.msra.mxu0 0.0
  %73 = vmatprep.subr.mxu0 0.0
  %74 = vmatpush1.msra.mxu0 0.0
  %75 = vmatprep.subr.mxu0 0.0
  %76 = vmatpush1.msra.mxu0 %v43
  %77 = vmatprep.subr.mxu0 0.0
  %78 = vmatpush2.msra.mxu0 0.0
  %79 = vmatprep.subr.mxu0 0.0
  %80 = vmatpush2.msra.mxu0 0.0
  %81 = vmatprep.subr.mxu0 0.0
  %82 = vmatpush2.msra.mxu0 0.0
  %83 = vmatprep.subr.mxu0 0.0
  %84 = vmatpush2.msra.mxu0 0.0
  %85 = vmatprep.subr.mxu0 0.0
  %86 = vmatpush2.msra.mxu0 0.0
  %87 = vmatprep.subr.mxu0 0.0
  %88 = vmatpush2.msra.mxu0 0.0
  %89 = vmatprep.subr.mxu0 0.0
  %90 = vmatpush2.msra.mxu0 0.0
  %91 = vmatprep.subr.mxu0 0.0
  %92 = vmatpush2.msra.mxu0 0.0
  %93 = vmatprep.subr.mxu0 0.0
  %94 = vmatpush2.msra.mxu0 0.0
  %95 = vmatprep.subr.mxu0 0.0
  %96 = vmatpush2.msra.mxu0 0.0
  %97 = vmatprep.subr.mxu0 0.0
  %98 = vmatpush2.msra.mxu0 0.0
  %99 = vmatprep.subr.mxu0 0.0
  %100 = vmatpush2.msra.mxu0 0.0
  %101 = vmatprep.subr.mxu0 0.0
  %102 = vmatpush2.msra.mxu0 0.0
  %103 = vmatprep.subr.mxu0 0.0
  %104 = vmatpush2.msra.mxu0 0.0
  %105 = vmatprep.subr.mxu0 0.0
  %106 = vmatpush2.msra.mxu0 0.0
  %107 = vmatprep.subr.mxu0 0.0
  %108 = vmatpush2.msra.mxu0 0.0
  %109 = vmatprep.mubr.f32.mxu0 0.0
  %110 = vmatmul.mubr.f32.gmra.mxu0 %v36
  %v111 = vpop.f32.mrf.mxu0
  %v112 = vadd.f32 %v32, %v111
  %v113 = vpop.f32.mrf.mxu0
  %114 = vmatprep.mubr.f32.mxu0 0.0
  %115 = vmatmul.mubr.f32.gmra.mxu0 %v39
  %v116 = vpop.f32.mrf.mxu0
  %v117 = vadd.f32 %v32, %v116
  %v118 = vpop.f32.mrf.mxu0
  %119 = vdwg.mxu0
  %v120 = vld [vmem:[%s3] sm:$0xf]
  %v121 = vld [vmem:[%s3 + $0x4] sm:$0xf]
  %v122 = vld [vmem:[%s3 + $0x8] sm:$0xf]
  %v123 = vld [vmem:[%s3 + $0xc] sm:$0xf]
  %v128 = vunpack.c.l.b16 %v120
  %v129 = vunpack.c.l.b16 %v121
  %v130 = vunpack.c.l.b16 %v122
  %v131 = vunpack.c.l.b16 %v123
  %v132 = vpack.c.b16 %v129, %v128
  %v133 = vpack.c.b16 %v131, %v130
  %vm136 = vcmask 261120
  %v138 = vsel %vm136, 0, 0
  %140 = vmatprep.subr.bf16.mxu0 0
  %141 = vmatpush1.bf16.msra.mxu0 0
  %142 = vmatprep.subr.bf16.mxu0 0
  %143 = vmatpush1.bf16.msra.mxu0 0
  %144 = vmatprep.subr.bf16.mxu0 0
  %145 = vmatpush1.bf16.msra.mxu0 0
  %146 = vmatprep.subr.bf16.mxu0 0
  %147 = vmatpush1.bf16.msra.mxu0 0
  %148 = vmatprep.subr.bf16.mxu0 0
  %149 = vmatpush1.bf16.msra.mxu0 0
  %150 = vmatprep.subr.bf16.mxu0 0
  %151 = vmatpush1.bf16.msra.mxu0 0
  %152 = vmatprep.subr.bf16.mxu0 0
  %153 = vmatpush1.bf16.msra.mxu0 %v133
  %154 = vmatprep.subr.bf16.mxu0 0
  %155 = vmatpush1.bf16.msra.mxu0 %v132
  %156 = vmatprep.subr.bf16.mxu0 0
  %157 = vmatpush2.bf16.msra.mxu0 0
  %158 = vmatprep.subr.bf16.mxu0 0
  %159 = vmatpush2.bf16.msra.mxu0 0
  %160 = vmatprep.subr.bf16.mxu0 0
  %161 = vmatpush2.bf16.msra.mxu0 0
  %162 = vmatprep.subr.bf16.mxu0 0
  %163 = vmatpush2.bf16.msra.mxu0 0
  %164 = vmatprep.subr.bf16.mxu0 0
  %165 = vmatpush2.bf16.msra.mxu0 0
  %166 = vmatprep.subr.bf16.mxu0 0
  %167 = vmatpush2.bf16.msra.mxu0 0
  %168 = vmatprep.subr.bf16.mxu0 0
  %169 = vmatpush2.bf16.msra.mxu0 0
  %170 = vmatprep.subr.bf16.mxu0 0
  %171 = vmatpush2.bf16.msra.mxu0 0
  %172 = vmatprep.mubr.bf16.mxu0 0
  %173 = vmatmul.mubr.bf16.gmra.mxu0 %v138
  %v174 = vpop.f32.mrf.mxu0
  %v175 = vadd.f32 0.0, %v174
  %v176 = vpop.f32.mrf.mxu0
  %v177 = vpop.f32.mrf.mxu0
  %v178 = vpop.f32.mrf.mxu0
  %179 = vdwg.mxu0
  %v180 = vadd.f32 %v112, %v175
  %v181 = vxor.u32 %v180, 2147483648
  %v182 = vmul.f32 %v181, 1.442695
  %v183 = vpow.pop %v182
  %v184 = vadd.f32 %v183, 1.0
  %v185 = vrcp.pop %v184
  %v186 = vmul.f32 1.0, %v185
  %v187 = vtanh.pop %v180
  %v188 = vmul.f32 %v186, 0.0
  %190 = vrot.lane.b32.xlu0 %v187, 64
  %v191 = vpop.permute.xlu0 %190
  %v193 = vmul.f32 %v186, %v191
  %195 = vrot.lane.b32.xlu0 %v193, 32
  %v196 = vpop.permute.xlu0 %195
  %v198 = vadd.f32 %v188, %v196
  %v199 = vtanh.pop %v198
  %201 = vrot.lane.b32.xlu0 %v199, 64
  %v202 = vpop.permute.xlu0 %201
  %v204 = vmul.f32 %v186, %v202
  %v205 = vpack.c.bf16 %v204, %v204
  %207 = vrot.lane.b32.xlu0 %v205, 32
  %v208 = vpop.permute.xlu0 %207
  %v210 = vsel %vm136, %v208, 0
  %212 = vmatprep.subr.bf16.mxu0 0
  %213 = vmatpush1.bf16.msra.mxu0 0
  %214 = vmatprep.subr.bf16.mxu0 0
  %215 = vmatpush1.bf16.msra.mxu0 0
  %216 = vmatprep.subr.bf16.mxu0 0
  %217 = vmatpush1.bf16.msra.mxu0 0
  %218 = vmatprep.subr.bf16.mxu0 0
  %219 = vmatpush1.bf16.msra.mxu0 0
  %220 = vmatprep.subr.bf16.mxu0 0
  %221 = vmatpush1.bf16.msra.mxu0 0
  %222 = vmatprep.subr.bf16.mxu0 0
  %223 = vmatpush1.bf16.msra.mxu0 0
  %224 = vmatprep.subr.bf16.mxu0 0
  %225 = vmatpush1.bf16.msra.mxu0 %v133
  %226 = vmatprep.subr.bf16.mxu0 0
  %227 = vmatpush1.bf16.msra.mxu0 %v132
  %228 = vmatprep.subr.bf16.mxu0 0
  %229 = vmatpush2.bf16.msra.mxu0 0
  %230 = vmatprep.subr.bf16.mxu0 0
  %231 = vmatpush2.bf16.msra.mxu0 0
  %232 = vmatprep.subr.bf16.mxu0 0
  %233 = vmatpush2.bf16.msra.mxu0 0
  %234 = vmatprep.subr.bf16.mxu0 0
  %235 = vmatpush2.bf16.msra.mxu0 0
  %236 = vmatprep.subr.bf16.mxu0 0
  %237 = vmatpush2.bf16.msra.mxu0 0
  %238 = vmatprep.subr.bf16.mxu0 0
  %239 = vmatpush2.bf16.msra.mxu0 0
  %240 = vmatprep.subr.bf16.mxu0 0
  %241 = vmatpush2.bf16.msra.mxu0 0
  %242 = vmatprep.subr.bf16.mxu0 0
  %243 = vmatpush2.bf16.msra.mxu0 0
  %244 = vmatprep.mubr.bf16.mxu0 0
  %245 = vmatmul.mubr.bf16.gmra.mxu0 %v210
  %v246 = vpop.f32.mrf.mxu0
  %v247 = vadd.f32 0.0, %v246
  %v248 = vpop.f32.mrf.mxu0
  %v249 = vpop.f32.mrf.mxu0
  %v250 = vpop.f32.mrf.mxu0
  %251 = vdwg.mxu0
  %v253 = vrot.slane %v247, 6
  %v255 = vadd.f32 %v112, %v253
  %v256 = vxor.u32 %v255, 2147483648
  %v257 = vmul.f32 %v256, 1.442695
  %v258 = vpow.pop %v257
  %v259 = vadd.f32 %v258, 1.0
  %v260 = vrcp.pop %v259
  %v261 = vmul.f32 1.0, %v260
  %v262 = vtanh.pop %v255
  %v264 = vrot.slane %v198, 6
  %v266 = vmul.f32 %v261, %v264
  %268 = vrot.lane.b32.xlu0 %v262, 64
  %v269 = vpop.permute.xlu0 %268
  %v271 = vmul.f32 %v261, %v269
  %273 = vrot.lane.b32.xlu0 %v271, 32
  %v274 = vpop.permute.xlu0 %273
  %v276 = vadd.f32 %v266, %v274
  %v277 = vtanh.pop %v276
  %279 = vrot.lane.b32.xlu0 %v277, 64
  %v280 = vpop.permute.xlu0 %279
  %v282 = vmul.f32 %v261, %v280
  %v283 = vpack.c.bf16 %v282, %v282
  %v285 = vrot.slane %v283, 1
  %286 = vrot.lane.b32.xlu0 %v285, 32
  %v287 = vpop.permute.xlu0 %286
  %v289 = vsel %vm136, %v287, 0
  %291 = vmatprep.subr.bf16.mxu0 0
  %292 = vmatpush1.bf16.msra.mxu0 0
  %293 = vmatprep.subr.bf16.mxu0 0
  %294 = vmatpush1.bf16.msra.mxu0 0
  %295 = vmatprep.subr.bf16.mxu0 0
  %296 = vmatpush1.bf16.msra.mxu0 0
  %297 = vmatprep.subr.bf16.mxu0 0
  %298 = vmatpush1.bf16.msra.mxu0 0
  %299 = vmatprep.subr.bf16.mxu0 0
  %300 = vmatpush1.bf16.msra.mxu0 0
  %301 = vmatprep.subr.bf16.mxu0 0
  %302 = vmatpush1.bf16.msra.mxu0 0
  %303 = vmatprep.subr.bf16.mxu0 0
  %304 = vmatpush1.bf16.msra.mxu0 %v133
  %305 = vmatprep.subr.bf16.mxu0 0
  %306 = vmatpush1.bf16.msra.mxu0 %v132
  %307 = vmatprep.subr.bf16.mxu0 0
  %308 = vmatpush2.bf16.msra.mxu0 0
  %309 = vmatprep.subr.bf16.mxu0 0
  %310 = vmatpush2.bf16.msra.mxu0 0
  %311 = vmatprep.subr.bf16.mxu0 0
  %312 = vmatpush2.bf16.msra.mxu0 0
  %313 = vmatprep.subr.bf16.mxu0 0
  %314 = vmatpush2.bf16.msra.mxu0 0
  %315 = vmatprep.subr.bf16.mxu0 0
  %316 = vmatpush2.bf16.msra.mxu0 0
  %317 = vmatprep.subr.bf16.mxu0 0
  %318 = vmatpush2.bf16.msra.mxu0 0
  %319 = vmatprep.subr.bf16.mxu0 0
  %320 = vmatpush2.bf16.msra.mxu0 0
  %321 = vmatprep.subr.bf16.mxu0 0
  %322 = vmatpush2.bf16.msra.mxu0 0
  %323 = vmatprep.mubr.bf16.mxu0 0
  %324 = vmatmul.mubr.bf16.gmra.mxu0 %v289
  %v325 = vpop.f32.mrf.mxu0
  %v326 = vadd.f32 0.0, %v325
  %v327 = vpop.f32.mrf.mxu0
  %v328 = vpop.f32.mrf.mxu0
  %v329 = vpop.f32.mrf.mxu0
  %330 = vdwg.mxu0
  %v332 = vrot.slane %v326, 4
  %v334 = vadd.f32 %v112, %v332
  %v335 = vxor.u32 %v334, 2147483648
  %v336 = vmul.f32 %v335, 1.442695
  %v337 = vpow.pop %v336
  %v338 = vadd.f32 %v337, 1.0
  %v339 = vrcp.pop %v338
  %v340 = vmul.f32 1.0, %v339
  %v341 = vtanh.pop %v334
  %v343 = vrot.slane %v276, 6
  %v345 = vmul.f32 %v340, %v343
  %347 = vrot.lane.b32.xlu0 %v341, 64
  %v348 = vpop.permute.xlu0 %347
  %v350 = vmul.f32 %v340, %v348
  %352 = vrot.lane.b32.xlu0 %v350, 32
  %v353 = vpop.permute.xlu0 %352
  %v355 = vadd.f32 %v345, %v353
  %v356 = vtanh.pop %v355
  %358 = vrot.lane.b32.xlu0 %v356, 64
  %v359 = vpop.permute.xlu0 %358
  %v361 = vmul.f32 %v340, %v359
  %v362 = vpack.c.bf16 %v361, %v361
  %v364 = vrot.slane %v362, 2
  %365 = vrot.lane.b32.xlu0 %v364, 32
  %v366 = vpop.permute.xlu0 %365
  %v368 = vsel %vm136, %v366, 0
  %370 = vmatprep.subr.bf16.mxu0 0
  %371 = vmatpush1.bf16.msra.mxu0 0
  %372 = vmatprep.subr.bf16.mxu0 0
  %373 = vmatpush1.bf16.msra.mxu0 0
  %374 = vmatprep.subr.bf16.mxu0 0
  %375 = vmatpush1.bf16.msra.mxu0 0
  %376 = vmatprep.subr.bf16.mxu0 0
  %377 = vmatpush1.bf16.msra.mxu0 0
  %378 = vmatprep.subr.bf16.mxu0 0
  %379 = vmatpush1.bf16.msra.mxu0 0
  %380 = vmatprep.subr.bf16.mxu0 0
  %381 = vmatpush1.bf16.msra.mxu0 0
  %382 = vmatprep.subr.bf16.mxu0 0
  %383 = vmatpush1.bf16.msra.mxu0 %v133
  %384 = vmatprep.subr.bf16.mxu0 0
  %385 = vmatpush1.bf16.msra.mxu0 %v132
  %386 = vmatprep.subr.bf16.mxu0 0
  %387 = vmatpush2.bf16.msra.mxu0 0
  %388 = vmatprep.subr.bf16.mxu0 0
  %389 = vmatpush2.bf16.msra.mxu0 0
  %390 = vmatprep.subr.bf16.mxu0 0
  %391 = vmatpush2.bf16.msra.mxu0 0
  %392 = vmatprep.subr.bf16.mxu0 0
  %393 = vmatpush2.bf16.msra.mxu0 0
  %394 = vmatprep.subr.bf16.mxu0 0
  %395 = vmatpush2.bf16.msra.mxu0 0
  %396 = vmatprep.subr.bf16.mxu0 0
  %397 = vmatpush2.bf16.msra.mxu0 0
  %398 = vmatprep.subr.bf16.mxu0 0
  %399 = vmatpush2.bf16.msra.mxu0 0
  %400 = vmatprep.subr.bf16.mxu0 0
  %401 = vmatpush2.bf16.msra.mxu0 0
  %402 = vmatprep.mubr.bf16.mxu0 0
  %403 = vmatmul.mubr.bf16.gmra.mxu0 %v368
  %v404 = vpop.f32.mrf.mxu0
  %v405 = vadd.f32 0.0, %v404
  %v406 = vpop.f32.mrf.mxu0
  %v407 = vpop.f32.mrf.mxu0
  %v408 = vpop.f32.mrf.mxu0
  %409 = vdwg.mxu0
  %v411 = vrot.slane %v405, 2
  %v413 = vadd.f32 %v112, %v411
  %v414 = vxor.u32 %v413, 2147483648
  %v415 = vmul.f32 %v414, 1.442695
  %v416 = vpow.pop %v415
  %v417 = vadd.f32 %v416, 1.0
  %v418 = vrcp.pop %v417
  %v419 = vmul.f32 1.0, %v418
  %v420 = vtanh.pop %v413
  %v422 = vrot.slane %v355, 6
  %v424 = vmul.f32 %v419, %v422
  %426 = vrot.lane.b32.xlu0 %v420, 64
  %v427 = vpop.permute.xlu0 %426
  %v429 = vmul.f32 %v419, %v427
  %431 = vrot.lane.b32.xlu0 %v429, 32
  %v432 = vpop.permute.xlu0 %431
  %v434 = vadd.f32 %v424, %v432
  %v435 = vtanh.pop %v434
  %437 = vrot.lane.b32.xlu0 %v435, 64
  %v438 = vpop.permute.xlu0 %437
  %v440 = vmul.f32 %v419, %v438
  %v441 = vpack.c.bf16 %v440, %v440
  %v443 = vrot.slane %v441, 3
  %444 = vrot.lane.b32.xlu0 %v443, 32
  %v445 = vpop.permute.xlu0 %444
  %v447 = vsel %vm136, %v445, 0
  %449 = vmatprep.subr.bf16.mxu0 0
  %450 = vmatpush1.bf16.msra.mxu0 0
  %451 = vmatprep.subr.bf16.mxu0 0
  %452 = vmatpush1.bf16.msra.mxu0 0
  %453 = vmatprep.subr.bf16.mxu0 0
  %454 = vmatpush1.bf16.msra.mxu0 0
  %455 = vmatprep.subr.bf16.mxu0 0
  %456 = vmatpush1.bf16.msra.mxu0 0
  %457 = vmatprep.subr.bf16.mxu0 0
  %458 = vmatpush1.bf16.msra.mxu0 0
  %459 = vmatprep.subr.bf16.mxu0 0
  %460 = vmatpush1.bf16.msra.mxu0 0
  %461 = vmatprep.subr.bf16.mxu0 0
  %462 = vmatpush1.bf16.msra.mxu0 %v133
  %463 = vmatprep.subr.bf16.mxu0 0
  %464 = vmatpush1.bf16.msra.mxu0 %v132
  %465 = vmatprep.subr.bf16.mxu0 0
  %466 = vmatpush2.bf16.msra.mxu0 0
  %467 = vmatprep.subr.bf16.mxu0 0
  %468 = vmatpush2.bf16.msra.mxu0 0
  %469 = vmatprep.subr.bf16.mxu0 0
  %470 = vmatpush2.bf16.msra.mxu0 0
  %471 = vmatprep.subr.bf16.mxu0 0
  %472 = vmatpush2.bf16.msra.mxu0 0
  %473 = vmatprep.subr.bf16.mxu0 0
  %474 = vmatpush2.bf16.msra.mxu0 0
  %475 = vmatprep.subr.bf16.mxu0 0
  %476 = vmatpush2.bf16.msra.mxu0 0
  %477 = vmatprep.subr.bf16.mxu0 0
  %478 = vmatpush2.bf16.msra.mxu0 0
  %479 = vmatprep.subr.bf16.mxu0 0
  %480 = vmatpush2.bf16.msra.mxu0 0
  %481 = vmatprep.mubr.bf16.mxu0 0
  %482 = vmatmul.mubr.bf16.gmra.mxu0 %v447
  %v483 = vpop.f32.mrf.mxu0
  %v484 = vadd.f32 0.0, %v483
  %v485 = vpop.f32.mrf.mxu0
  %v486 = vpop.f32.mrf.mxu0
  %v487 = vpop.f32.mrf.mxu0
  %488 = vdwg.mxu0
  %v489 = vadd.f32 %v117, %v484
  %v490 = vxor.u32 %v489, 2147483648
  %v491 = vmul.f32 %v490, 1.442695
  %v492 = vpow.pop %v491
  %v493 = vadd.f32 %v492, 1.0
  %v494 = vrcp.pop %v493
  %v495 = vmul.f32 1.0, %v494
  %v496 = vtanh.pop %v489
  %v498 = vrot.slane %v434, 6
  %v500 = vmul.f32 %v495, %v498
  %502 = vrot.lane.b32.xlu0 %v496, 64
  %v503 = vpop.permute.xlu0 %502
  %v505 = vmul.f32 %v495, %v503
  %507 = vrot.lane.b32.xlu0 %v505, 32
  %v508 = vpop.permute.xlu0 %507
  %v510 = vadd.f32 %v500, %v508
  %v511 = vtanh.pop %v510
  %513 = vrot.lane.b32.xlu0 %v511, 64
  %v514 = vpop.permute.xlu0 %513
  %v516 = vmul.f32 %v495, %v514
  %v517 = vpack.c.bf16 %v516, %v516
  %519 = vrot.lane.b32.xlu0 %v517, 32
  %v520 = vpop.permute.xlu0 %519
  %v522 = vsel %vm136, %v520, 0
  %524 = vmatprep.subr.bf16.mxu0 0
  %525 = vmatpush1.bf16.msra.mxu0 0
  %526 = vmatprep.subr.bf16.mxu0 0
  %527 = vmatpush1.bf16.msra.mxu0 0
  %528 = vmatprep.subr.bf16.mxu0 0
  %529 = vmatpush1.bf16.msra.mxu0 0
  %530 = vmatprep.subr.bf16.mxu0 0
  %531 = vmatpush1.bf16.msra.mxu0 0
  %532 = vmatprep.subr.bf16.mxu0 0
  %533 = vmatpush1.bf16.msra.mxu0 0
  %534 = vmatprep.subr.bf16.mxu0 0
  %535 = vmatpush1.bf16.msra.mxu0 0
  %536 = vmatprep.subr.bf16.mxu0 0
  %537 = vmatpush1.bf16.msra.mxu0 %v133
  %538 = vmatprep.subr.bf16.mxu0 0
  %539 = vmatpush1.bf16.msra.mxu0 %v132
  %540 = vmatprep.subr.bf16.mxu0 0
  %541 = vmatpush2.bf16.msra.mxu0 0
  %542 = vmatprep.subr.bf16.mxu0 0
  %543 = vmatpush2.bf16.msra.mxu0 0
  %544 = vmatprep.subr.bf16.mxu0 0
  %545 = vmatpush2.bf16.msra.mxu0 0
  %546 = vmatprep.subr.bf16.mxu0 0
  %547 = vmatpush2.bf16.msra.mxu0 0
  %548 = vmatprep.subr.bf16.mxu0 0
  %549 = vmatpush2.bf16.msra.mxu0 0
  %550 = vmatprep.subr.bf16.mxu0 0
  %551 = vmatpush2.bf16.msra.mxu0 0
  %552 = vmatprep.subr.bf16.mxu0 0
  %553 = vmatpush2.bf16.msra.mxu0 0
  %554 = vmatprep.subr.bf16.mxu0 0
  %555 = vmatpush2.bf16.msra.mxu0 0
  %556 = vmatprep.mubr.bf16.mxu0 0
  %557 = vmatmul.mubr.bf16.gmra.mxu0 %v522
  %v558 = vpop.f32.mrf.mxu0
  %v559 = vadd.f32 0.0, %v558
  %v560 = vpop.f32.mrf.mxu0
  %v561 = vpop.f32.mrf.mxu0
  %v562 = vpop.f32.mrf.mxu0
  %563 = vdwg.mxu0
  %v565 = vrot.slane %v559, 6
  %v567 = vadd.f32 %v117, %v565
  %v568 = vxor.u32 %v567, 2147483648
  %v569 = vmul.f32 %v568, 1.442695
  %v570 = vpow.pop %v569
  %v571 = vadd.f32 %v570, 1.0
  %v572 = vrcp.pop %v571
  %v573 = vmul.f32 1.0, %v572
  %v574 = vtanh.pop %v567
  %v576 = vrot.slane %v510, 6
  %v578 = vmul.f32 %v573, %v576
  %580 = vrot.lane.b32.xlu0 %v574, 64
  %v581 = vpop.permute.xlu0 %580
  %v583 = vmul.f32 %v573, %v581
  %585 = vrot.lane.b32.xlu0 %v583, 32
  %v586 = vpop.permute.xlu0 %585
  %v588 = vadd.f32 %v578, %v586
  %v589 = vtanh.pop %v588
  %591 = vrot.lane.b32.xlu0 %v589, 64
  %v592 = vpop.permute.xlu0 %591
  %v594 = vmul.f32 %v573, %v592
  %v595 = vpack.c.bf16 %v594, %v594
  %v597 = vrot.slane %v595, 1
  %598 = vrot.lane.b32.xlu0 %v597, 32
  %v599 = vpop.permute.xlu0 %598
  %v601 = vsel %vm136, %v599, 0
  %603 = vmatprep.subr.bf16.mxu0 0
  %604 = vmatpush1.bf16.msra.mxu0 0
  %605 = vmatprep.subr.bf16.mxu0 0
  %606 = vmatpush1.bf16.msra.mxu0 0
  %607 = vmatprep.subr.bf16.mxu0 0
  %608 = vmatpush1.bf16.msra.mxu0 0
  %609 = vmatprep.subr.bf16.mxu0 0
  %610 = vmatpush1.bf16.msra.mxu0 0
  %611 = vmatprep.subr.bf16.mxu0 0
  %612 = vmatpush1.bf16.msra.mxu0 0
  %613 = vmatprep.subr.bf16.mxu0 0
  %614 = vmatpush1.bf16.msra.mxu0 0
  %615 = vmatprep.subr.bf16.mxu0 0
  %616 = vmatpush1.bf16.msra.mxu0 %v133
  %617 = vmatprep.subr.bf16.mxu0 0
  %618 = vmatpush1.bf16.msra.mxu0 %v132
  %619 = vmatprep.subr.bf16.mxu0 0
  %620 = vmatpush2.bf16.msra.mxu0 0
  %621 = vmatprep.subr.bf16.mxu0 0
  %622 = vmatpush2.bf16.msra.mxu0 0
  %623 = vmatprep.subr.bf16.mxu0 0
  %624 = vmatpush2.bf16.msra.mxu0 0
  %625 = vmatprep.subr.bf16.mxu0 0
  %626 = vmatpush2.bf16.msra.mxu0 0
  %627 = vmatprep.subr.bf16.mxu0 0
  %628 = vmatpush2.bf16.msra.mxu0 0
  %629 = vmatprep.subr.bf16.mxu0 0
  %630 = vmatpush2.bf16.msra.mxu0 0
  %631 = vmatprep.subr.bf16.mxu0 0
  %632 = vmatpush2.bf16.msra.mxu0 0
  %633 = vmatprep.subr.bf16.mxu0 0
  %634 = vmatpush2.bf16.msra.mxu0 0
  %635 = vmatprep.mubr.bf16.mxu0 0
  %636 = vmatmul.mubr.bf16.gmra.mxu0 %v601
  %v637 = vpop.f32.mrf.mxu0
  %v638 = vadd.f32 0.0, %v637
  %v639 = vpop.f32.mrf.mxu0
  %v640 = vpop.f32.mrf.mxu0
  %v641 = vpop.f32.mrf.mxu0
  %642 = vdwg.mxu0
  %v644 = vrot.slane %v638, 4
  %v646 = vadd.f32 %v117, %v644
  %v647 = vxor.u32 %v646, 2147483648
  %v648 = vmul.f32 %v647, 1.442695
  %v649 = vpow.pop %v648
  %v650 = vadd.f32 %v649, 1.0
  %v651 = vrcp.pop %v650
  %v652 = vmul.f32 1.0, %v651
  %v653 = vtanh.pop %v646
  %v655 = vrot.slane %v588, 6
  %v657 = vmul.f32 %v652, %v655
  %659 = vrot.lane.b32.xlu0 %v653, 64
  %v660 = vpop.permute.xlu0 %659
  %v662 = vmul.f32 %v652, %v660
  %664 = vrot.lane.b32.xlu0 %v662, 32
  %v665 = vpop.permute.xlu0 %664
  %v667 = vadd.f32 %v657, %v665
  %v668 = vtanh.pop %v667
  %670 = vrot.lane.b32.xlu0 %v668, 64
  %v671 = vpop.permute.xlu0 %670
  %v673 = vmul.f32 %v652, %v671
  %v674 = vpack.c.bf16 %v673, %v673
  %v676 = vrot.slane %v674, 2
  %677 = vrot.lane.b32.xlu0 %v676, 32
  %v678 = vpop.permute.xlu0 %677
  %v680 = vsel %vm136, %v678, 0
  %682 = vmatprep.subr.bf16.mxu0 0
  %683 = vmatpush1.bf16.msra.mxu0 0
  %684 = vmatprep.subr.bf16.mxu0 0
  %685 = vmatpush1.bf16.msra.mxu0 0
  %686 = vmatprep.subr.bf16.mxu0 0
  %687 = vmatpush1.bf16.msra.mxu0 0
  %688 = vmatprep.subr.bf16.mxu0 0
  %689 = vmatpush1.bf16.msra.mxu0 0
  %690 = vmatprep.subr.bf16.mxu0 0
  %691 = vmatpush1.bf16.msra.mxu0 0
  %692 = vmatprep.subr.bf16.mxu0 0
  %693 = vmatpush1.bf16.msra.mxu0 0
  %694 = vmatprep.subr.bf16.mxu0 0
  %695 = vmatpush1.bf16.msra.mxu0 %v133
  %696 = vmatprep.subr.bf16.mxu0 0
  %697 = vmatpush1.bf16.msra.mxu0 %v132
  %698 = vmatprep.subr.bf16.mxu0 0
  %699 = vmatpush2.bf16.msra.mxu0 0
  %700 = vmatprep.subr.bf16.mxu0 0
  %701 = vmatpush2.bf16.msra.mxu0 0
  %702 = vmatprep.subr.bf16.mxu0 0
  %703 = vmatpush2.bf16.msra.mxu0 0
  %704 = vmatprep.subr.bf16.mxu0 0
  %705 = vmatpush2.bf16.msra.mxu0 0
  %706 = vmatprep.subr.bf16.mxu0 0
  %707 = vmatpush2.bf16.msra.mxu0 0
  %708 = vmatprep.subr.bf16.mxu0 0
  %709 = vmatpush2.bf16.msra.mxu0 0
  %710 = vmatprep.subr.bf16.mxu0 0
  %711 = vmatpush2.bf16.msra.mxu0 0
  %712 = vmatprep.subr.bf16.mxu0 0
  %713 = vmatpush2.bf16.msra.mxu0 0
  %714 = vmatprep.mubr.bf16.mxu0 0
  %715 = vmatmul.mubr.bf16.gmra.mxu0 %v680
  %v716 = vpop.f32.mrf.mxu0
  %v717 = vadd.f32 0.0, %v716
  %v718 = vpop.f32.mrf.mxu0
  %v719 = vpop.f32.mrf.mxu0
  %v720 = vpop.f32.mrf.mxu0
  %721 = vdwg.mxu0
  %v723 = vrot.slane %v717, 2
  %v725 = vadd.f32 %v117, %v723
  %v726 = vxor.u32 %v725, 2147483648
  %v727 = vmul.f32 %v726, 1.442695
  %v728 = vpow.pop %v727
  %v729 = vadd.f32 %v728, 1.0
  %v730 = vrcp.pop %v729
  %v731 = vmul.f32 1.0, %v730
  %v732 = vtanh.pop %v725
  %v734 = vrot.slane %v667, 6
  %v736 = vmul.f32 %v731, %v734
  %738 = vrot.lane.b32.xlu0 %v732, 64
  %v739 = vpop.permute.xlu0 %738
  %v741 = vmul.f32 %v731, %v739
  %743 = vrot.lane.b32.xlu0 %v741, 32
  %v744 = vpop.permute.xlu0 %743
  %v746 = vadd.f32 %v736, %v744
  %v747 = vtanh.pop %v746
  %749 = vrot.lane.b32.xlu0 %v747, 64
  %v750 = vpop.permute.xlu0 %749
  %v752 = vmul.f32 %v731, %v750
  %vm753 = vcmask 1041408
  %v754 = vsel %vm753, %v204, %v282
  %v755 = vsel %vm41, %v754, %v361
  %vm756 = vcmask 1045504
  %v757 = vsel %vm756, %v755, %v440
  %v758 = vsel %vm753, %v516, %v594
  %v759 = vsel %vm41, %v758, %v673
  %v760 = vsel %vm756, %v759, %v752
  %v761 = vld [vmem:[%s4] sm:$0xff]
  %v762 = vld [vmem:[%s4 + $0x8] sm:$0xff]
  %v763 = vld [vmem:[%s4 + $0x10] sm:$0xff]
  %v764 = vld [vmem:[%s4 + $0x18] sm:$0xff]
  %v765 = vld [vmem:[%s5] sm:$0x1]
  %v767 = vlaneseq
  %v768 = vshrl.u32 %v767, 7
  %v769 = vsub.s32 0, %v768
  %v770 = vrot.slane %v765, %v769
  %774 = vrot.lane.b32.xlu0 %v757, 32
  %v775 = vpop.permute.xlu0 %774
  %776 = vrot.lane.b32.xlu0 %v760, 32
  %v777 = vpop.permute.xlu0 %776
  %v778 = vsel %vm136, %v775, 0
  %v780 = vsel %vm136, %v777, 0
  %782 = vmatprep.subr.mxu0 0.0
  %783 = vmatpush1.msra.mxu0 0.0
  %784 = vmatprep.subr.mxu0 0.0
  %785 = vmatpush1.msra.mxu0 0.0
  %786 = vmatprep.subr.mxu0 0.0
  %787 = vmatpush1.msra.mxu0 0.0
  %788 = vmatprep.subr.mxu0 0.0
  %789 = vmatpush1.msra.mxu0 0.0
  %790 = vmatprep.subr.mxu0 0.0
  %791 = vmatpush1.msra.mxu0 0.0
  %792 = vmatprep.subr.mxu0 0.0
  %793 = vmatpush1.msra.mxu0 0.0
  %794 = vmatprep.subr.mxu0 0.0
  %795 = vmatpush1.msra.mxu0 0.0
  %796 = vmatprep.subr.mxu0 0.0
  %797 = vmatpush1.msra.mxu0 0.0
  %798 = vmatprep.subr.mxu0 0.0
  %799 = vmatpush1.msra.mxu0 0.0
  %800 = vmatprep.subr.mxu0 0.0
  %801 = vmatpush1.msra.mxu0 0.0
  %802 = vmatprep.subr.mxu0 0.0
  %803 = vmatpush1.msra.mxu0 0.0
  %804 = vmatprep.subr.mxu0 0.0
  %805 = vmatpush1.msra.mxu0 0.0
  %806 = vmatprep.subr.mxu0 0.0
  %807 = vmatpush1.msra.mxu0 %v764
  %808 = vmatprep.subr.mxu0 0.0
  %809 = vmatpush1.msra.mxu0 %v763
  %810 = vmatprep.subr.mxu0 0.0
  %811 = vmatpush1.msra.mxu0 %v762
  %812 = vmatprep.subr.mxu0 0.0
  %813 = vmatpush1.msra.mxu0 %v761
  %814 = vmatprep.subr.mxu0 0.0
  %815 = vmatpush2.msra.mxu0 0.0
  %816 = vmatprep.subr.mxu0 0.0
  %817 = vmatpush2.msra.mxu0 0.0
  %818 = vmatprep.subr.mxu0 0.0
  %819 = vmatpush2.msra.mxu0 0.0
  %820 = vmatprep.subr.mxu0 0.0
  %821 = vmatpush2.msra.mxu0 0.0
  %822 = vmatprep.subr.mxu0 0.0
  %823 = vmatpush2.msra.mxu0 0.0
  %824 = vmatprep.subr.mxu0 0.0
  %825 = vmatpush2.msra.mxu0 0.0
  %826 = vmatprep.subr.mxu0 0.0
  %827 = vmatpush2.msra.mxu0 0.0
  %828 = vmatprep.subr.mxu0 0.0
  %829 = vmatpush2.msra.mxu0 0.0
  %830 = vmatprep.subr.mxu0 0.0
  %831 = vmatpush2.msra.mxu0 0.0
  %832 = vmatprep.subr.mxu0 0.0
  %833 = vmatpush2.msra.mxu0 0.0
  %834 = vmatprep.subr.mxu0 0.0
  %835 = vmatpush2.msra.mxu0 0.0
  %836 = vmatprep.subr.mxu0 0.0
  %837 = vmatpush2.msra.mxu0 0.0
  %838 = vmatprep.subr.mxu0 0.0
  %839 = vmatpush2.msra.mxu0 0.0
  %840 = vmatprep.subr.mxu0 0.0
  %841 = vmatpush2.msra.mxu0 0.0
  %842 = vmatprep.subr.mxu0 0.0
  %843 = vmatpush2.msra.mxu0 0.0
  %844 = vmatprep.subr.mxu0 0.0
  %845 = vmatpush2.msra.mxu0 0.0
  %846 = vmatprep.mubr.f32.mxu0 0.0
  %847 = vmatmul.mubr.f32.gmra.mxu0 %v778
  %v848 = vpop.f32.mrf.mxu0
  %v849 = vadd.f32 %v770, %v848
  %v850 = vpop.f32.mrf.mxu0
  %851 = vmatprep.mubr.f32.mxu0 0.0
  %852 = vmatmul.mubr.f32.gmra.mxu0 %v780
  %v853 = vpop.f32.mrf.mxu0
  %v854 = vadd.f32 %v770, %v853
  %v855 = vpop.f32.mrf.mxu0
  %856 = vdwg.mxu0
  %857 = vst [vmem:[%s6] sm:$0xff] %v849
  %858 = vst [vmem:[%s6 + $0x8] sm:$0xff] %v854
  // Predicated region
  $region26: #{base_model_forward.1} parent=0 // pred_check
    _
  $region27: #{base_model_forward.1} parent=0 // pred_check_branch
    %860 = sbr.rel (0) target = $region29
  $region28: #{base_model_forward.1} parent=0 // pred_region
    _
  $region29: #{base_model_forward.1} parent=0 // pred_fallthru
    _
  // Predicated region
  $region30: #{base_model_forward.1} parent=0 // pred_check
    _
  $region31: #{base_model_forward.1} parent=0 // pred_check_branch
    %862 = sbr.rel (0) target = $region33
  $region32: #{base_model_forward.1} parent=0 // pred_region
    _
  $region33: #{base_model_forward.1} parent=0 // pred_fallthru
    _

</llo_original>
